<compile_context>
chip_gen: v6e
topology: v6e:2x2x1
jax: 0.10.0
libtpu: 0.0.40
codegen_flags: <defaults>
</compile_context>

<pallas_src>
import functools
import math

import jax
import jax.numpy as jnp
from jax import lax
from jax.experimental import pallas as pl
from jax.experimental.pallas import tpu as pltpu


def _round_up(x, m):
    return (x + m - 1) // m * m


def _geometric_window_sum(x, length, ratio):
    """F[t] = sum_{k=0}^{length-1} ratio**k * x[(t + k) % Tp]  (circular).

    Built with O(log length) pltpu.roll shifted multiply-adds via window
    doubling: F_{a+b}[t] = F_a[t] + ratio**a * F_b[(t + a) % Tp].
    """
    tp = x.shape[-1]

    def fwd(y, s):                       # y shifted forward: out[t] = y[(t+s)%Tp]
        return y if s == 0 else pltpu.roll(y, shift=(-s) % tp, axis=1)

    result, res_len = None, 0            # accumulated window [0, res_len)
    block, blk_len = x, 1                # power-of-two window [0, blk_len)
    bits = length
    while bits:
        if bits & 1:
            if result is None:
                result, res_len = block, blk_len
            else:
                result = result + (ratio ** res_len) * fwd(block, res_len)
                res_len += blk_len
        bits >>= 1
        if bits:                         # only grow the block if still needed
            block = block + (ratio ** blk_len) * fwd(block, blk_len)
            blk_len *= 2
    return result


def _spike_position_loss_kernel(pred_ref, target_ref, mask_ref, out_ref, *,
                                filt_len, pad, ratio):
    """Partial sums for one (batch, channel-tile) block.

    pred_ref/target_ref: [c_blk, Tp] f32, T on lanes, zero padded.
    mask_ref:            [1, Tp]     f32 (0/1), zero in the padded tail.
    out_ref:             [1, 128]    f32; lane 0 = masked BCE sum,
                                          lane 1 = masked VR squared-error sum.
    """
    p = pred_ref[...]
    t = target_ref[...]
    m = mask_ref[...]
    valid = m > 0.5                       # [1, Tp]; broadcasts over sublanes

    # ---- position loss partial: masked BCE sum ------------------------------
    # Exact torch.binary_cross_entropy semantics: per-term log clamped at -100
    # (also keeps the zero-padded rows finite: 0 * (-100) == 0, no NaN).
    log_p = jnp.maximum(jnp.log(p), -100.0)
    log_1mp = jnp.maximum(jnp.log(1.0 - p), -100.0)
    bce = -(t * log_p + (1.0 - t) * log_1mp)
    bce_sum = jnp.sum(jnp.where(valid, bce, 0.0))

    # ---- van-Rossum partial: filter the *difference* once (conv is linear) --
    # filt[t] = sum_k ratio**k * d[t + k - pad], zero-extended outside [0, T).
    # The wrapper guarantees Tp >= T + max(pad, L-1-pad), so the circular rolls
    # only ever read the zero-padded tail for masked-in output positions.
    d = p - t
    f = _geometric_window_sum(d, filt_len, ratio)
    if pad:
        f = pltpu.roll(f, shift=pad, axis=1)   # align: filt[t] = F[(t - pad) % Tp]
    vr_sum = jnp.sum(jnp.where(valid, f * f, 0.0))

    # ---- lane-dense partial-sum row ------------------------------------------
    lane = lax.broadcasted_iota(jnp.int32, (1, 128), 1)
    out_ref[...] = (jnp.where(lane == 0, bce_sum, 0.0)
                    + jnp.where(lane == 1, vr_sum, 0.0))


def spike_position_loss(pred, target, mask=None, *, tau=5.0,
                        lambda_pos=1.0, lambda_vr=0.01):
    """pred, target: [B, T, C] float in (0,1)/[0,1]; mask: [B, T] 0/1 or None."""
    B, T, C = pred.shape
    L = int(6 * tau)
    assert L >= 1, "tau too small: empty van-Rossum kernel"
    pad = L // 2
    ratio = float(math.exp(-1.0 / tau))   # taps are exp(-k/tau) = ratio**k

    # Lane-dense layout: T on lanes with enough zero slack that circular rolls
    # never wrap into real data for valid output positions.
    halo = max(pad, L - 1 - pad)
    t_pad = _round_up(T + halo, 128)

    # Channel tile: multiple of 8, big enough to amortize per-grid-step
    # overhead, small enough that double-buffered blocks stay << scoped VMEM.
    c_blk_cap = max(8, min(512, (2 * 1024 * 1024 // (4 * t_pad)) // 8 * 8))
    c_blk = min(_round_up(C, 8), c_blk_cap)
    c_pad = _round_up(C, c_blk)
    nc = c_pad // c_blk

    def relayout(x):
        x = jnp.transpose(x.astype(jnp.float32), (0, 2, 1))    # [B, C, T]
        return jnp.pad(x, ((0, 0), (0, c_pad - C), (0, t_pad - T)))

    pred_p = relayout(pred)
    targ_p = relayout(target)

    mask2 = (jnp.ones((B, T), jnp.float32) if mask is None
             else mask.astype(jnp.float32))
    mask_p = jnp.pad(mask2[:, None, :], ((0, 0), (0, 0), (0, t_pad - T)))

    kernel = functools.partial(_spike_position_loss_kernel,
                               filt_len=L, pad=pad, ratio=ratio)

    partials = pl.pallas_call(
        kernel,
        out_shape=jax.ShapeDtypeStruct((B * nc, 1, 128), jnp.float32),
        grid=(B, nc),
        in_specs=[
            pl.BlockSpec((None, c_blk, t_pad), lambda b, c: (b, c, 0)),  # pred
            pl.BlockSpec((None, c_blk, t_pad), lambda b, c: (b, c, 0)),  # target
            pl.BlockSpec((None, 1, t_pad), lambda b, c: (b, 0, 0)),      # mask
        ],
        out_specs=pl.BlockSpec((None, 1, 128), lambda b, c: (b * nc + c, 0, 0)),
        compiler_params=pltpu.CompilerParams(
            dimension_semantics=("parallel", "parallel"),
            vmem_limit_bytes=32 * 1024 * 1024),
    )(pred_p, targ_p, mask_p)

    # Tiny normalization epilogue in XLA: both losses share the same count
    # (number of masked elements).  NOTE: like the torch reference, an
    # all-zero mask yields inf/NaN.
    bce_total = jnp.sum(partials[:, 0, 0])
    vr_total = jnp.sum(partials[:, 0, 1])
    count = jnp.float32(C) * jnp.sum(mask2)
    inv_count = 1.0 / count
    return lambda_pos * bce_total * inv_count + lambda_vr * vr_total * inv_count


def _reference_loss(pred, target, mask, tau, lambda_pos, lambda_vr):
    """Pure-JAX reference mirroring the PyTorch forward (for sanity check)."""
    B, T, C = pred.shape
    L = int(6 * tau)
    pad = L // 2
    w = jnp.exp(-jnp.arange(L, dtype=jnp.float32) / jnp.float32(tau))
    m3 = (jnp.ones((B, T, C), jnp.float32) if mask is None
          else jnp.broadcast_to(mask.astype(jnp.float32)[:, :, None], (B, T, C)))
    log_p = jnp.maximum(jnp.log(pred), -100.0)
    log_1mp = jnp.maximum(jnp.log(1.0 - pred), -100.0)
    bce = -(target * log_p + (1.0 - target) * log_1mp)
    count = jnp.sum(m3)
    pos_loss = jnp.sum(bce * m3) / count
    # conv1d (cross-correlation) with zero padding, truncated to first T samples
    xp_p = jnp.pad(pred, ((0, 0), (pad, pad), (0, 0)))
    xp_t = jnp.pad(target, ((0, 0), (pad, pad), (0, 0)))
    p_f = sum(w[k] * xp_p[:, k:k + T, :] for k in range(L))
    t_f = sum(w[k] * xp_t[:, k:k + T, :] for k in range(L))
    d = p_f - t_f
    vr_loss = jnp.sum(d * d * m3) / count
    return lambda_pos * pos_loss + lambda_vr * vr_loss


if __name__ == "__main__":
    key = jax.random.PRNGKey(0)
    k1, k2, k3 = jax.random.split(key, 3)

    B, T, C = 2, 16, 4
    tau = 5.0

    # pred must be probabilities in (0, 1); target is a binary spike train.
    pred = jax.nn.sigmoid(jax.random.normal(k1, (B, T, C), dtype=jnp.float32))
    target = jax.random.bernoulli(k2, p=0.3, shape=(B, T, C)).astype(jnp.float32)
    # mask: valid time steps per batch element (some zeros to exercise masking)
    lengths = jnp.array([T, T - 4], dtype=jnp.int32)
    mask = (jnp.arange(T)[None, :] < lengths[:, None]).astype(jnp.float32)

    loss = spike_position_loss(pred, target, mask, tau=tau,
                               lambda_pos=1.0, lambda_vr=0.01)
    loss = jax.block_until_ready(loss)

    ref = _reference_loss(pred, target, mask, tau, 1.0, 0.01)
    assert jnp.allclose(loss, ref, rtol=1e-4, atol=1e-5), (loss, ref)

    print("KERNEL_OK")
</pallas_src>

<mosaic_0001>
module attributes {stable_mosaic.version = 11 : i64} {
  func.func @_spike_position_loss_kernel(%arg0: i32, %arg1: i32, %arg2: memref<1x8x128xf32, #tpu.memory_space<vmem>>, %arg3: memref<1x8x128xf32, #tpu.memory_space<vmem>>, %arg4: memref<1x1x128xf32, #tpu.memory_space<vmem>>, %arg5: memref<1x1x128xf32, #tpu.memory_space<vmem>>) attributes {dimension_semantics = [#tpu.dimension_semantics<parallel>, #tpu.dimension_semantics<parallel>], iteration_bounds = array<i64: 2, 1>, scalar_prefetch = 0 : i64, scratch_operands = 0 : i64, tpu.core_type = #tpu.core_type<tc>, window_params = [{transform_indices = @transform_0, window_bounds = array<i64: 1, 8, 128>}, {transform_indices = @transform_1, window_bounds = array<i64: 1, 8, 128>}, {transform_indices = @transform_2, window_bounds = array<i64: 1, 1, 128>}, {transform_indices = @transform_3, window_bounds = array<i64: 1, 1, 128>}]} {
    %c0 = arith.constant 0 : index
    %c0_0 = arith.constant 0 : index
    %c0_1 = arith.constant 0 : index
    %0 = vector.load %arg2[%c0, %c0_0, %c0_1] : memref<1x8x128xf32, #tpu.memory_space<vmem>>, vector<1x8x128xf32>
    %1 = vector.shape_cast %0 : vector<1x8x128xf32> to vector<8x128xf32>
    %c0_2 = arith.constant 0 : index
    %c0_3 = arith.constant 0 : index
    %c0_4 = arith.constant 0 : index
    %2 = vector.load %arg3[%c0_2, %c0_3, %c0_4] : memref<1x8x128xf32, #tpu.memory_space<vmem>>, vector<1x8x128xf32>
    %3 = vector.shape_cast %2 : vector<1x8x128xf32> to vector<8x128xf32>
    %c0_5 = arith.constant 0 : index
    %c0_6 = arith.constant 0 : index
    %c0_7 = arith.constant 0 : index
    %4 = vector.load %arg4[%c0_5, %c0_6, %c0_7] : memref<1x1x128xf32, #tpu.memory_space<vmem>>, vector<1x1x128xf32>
    %5 = vector.shape_cast %4 : vector<1x1x128xf32> to vector<1x128xf32>
    %cst = arith.constant 5.000000e-01 : f32
    %6 = vector.broadcast %cst : f32 to vector<1x128xf32>
    %7 = arith.cmpf ogt, %5, %6 : vector<1x128xf32>
    %8 = math.log %1 : vector<8x128xf32>
    %cst_8 = arith.constant -1.000000e+02 : f32
    %9 = vector.broadcast %cst_8 : f32 to vector<8x128xf32>
    %10 = arith.maximumf %8, %9 : vector<8x128xf32>
    %cst_9 = arith.constant 1.000000e+00 : f32
    %11 = vector.broadcast %cst_9 : f32 to vector<8x128xf32>
    %12 = arith.subf %11, %1 : vector<8x128xf32>
    %13 = math.log %12 : vector<8x128xf32>
    %cst_10 = arith.constant -1.000000e+02 : f32
    %14 = vector.broadcast %cst_10 : f32 to vector<8x128xf32>
    %15 = arith.maximumf %13, %14 : vector<8x128xf32>
    %16 = arith.mulf %3, %10 : vector<8x128xf32>
    %cst_11 = arith.constant 1.000000e+00 : f32
    %17 = vector.broadcast %cst_11 : f32 to vector<8x128xf32>
    %18 = arith.subf %17, %3 : vector<8x128xf32>
    %19 = arith.mulf %18, %15 : vector<8x128xf32>
    %20 = arith.addf %16, %19 : vector<8x128xf32>
    %cst_12 = arith.constant 0.000000e+00 : f32
    %21 = vector.broadcast %cst_12 : f32 to vector<8x128xf32>
    %22 = arith.subf %21, %20 : vector<8x128xf32>
    %cst_13 = arith.constant 0.000000e+00 : f32
    %23 = vector.shape_cast %7 : vector<1x128xi1> to vector<1x128xi1>
    %24 = vector.broadcast %23 : vector<1x128xi1> to vector<8x128xi1>
    %25 = vector.broadcast %cst_13 : f32 to vector<8x128xf32>
    %26 = arith.select %24, %22, %25 : vector<8x128xi1>, vector<8x128xf32>
    %27 = vector.shape_cast %26 : vector<8x128xf32> to vector<1x8x128xf32>
    %cst_14 = arith.constant dense<0.000000e+00> : vector<1xf32>
    %28 = vector.multi_reduction <add>, %27, %cst_14 [1, 2] : vector<1x8x128xf32> to vector<1xf32>
    %29 = vector.shape_cast %28 : vector<1xf32> to vector<1x1x1xf32>
    %30 = vector.extract %29[0, 0, 0] : f32 from vector<1x1x1xf32>
    %31 = arith.subf %1, %3 : vector<8x128xf32>
    %c127_i32 = arith.constant 127 : i32
    %32 = tpu.dynamic_rotate %31 by %c127_i32 dim 1 : vector<8x128xf32>, i32 -> vector<8x128xf32>
    %cst_15 = arith.constant 0.818730771 : f32
    %33 = vector.broadcast %cst_15 : f32 to vector<8x128xf32>
    %34 = arith.mulf %33, %32 : vector<8x128xf32>
    %35 = arith.addf %31, %34 : vector<8x128xf32>
    %c126_i32 = arith.constant 126 : i32
    %36 = tpu.dynamic_rotate %35 by %c126_i32 dim 1 : vector<8x128xf32>, i32 -> vector<8x128xf32>
    %cst_16 = arith.constant 0.670320034 : f32
    %37 = vector.broadcast %cst_16 : f32 to vector<8x128xf32>
    %38 = arith.mulf %37, %36 : vector<8x128xf32>
    %39 = arith.addf %35, %38 : vector<8x128xf32>
    %c126_i32_17 = arith.constant 126 : i32
    %40 = tpu.dynamic_rotate %39 by %c126_i32_17 dim 1 : vector<8x128xf32>, i32 -> vector<8x128xf32>
    %cst_18 = arith.constant 0.670320034 : f32
    %41 = vector.broadcast %cst_18 : f32 to vector<8x128xf32>
    %42 = arith.mulf %41, %40 : vector<8x128xf32>
    %43 = arith.addf %35, %42 : vector<8x128xf32>
    %c124_i32 = arith.constant 124 : i32
    %44 = tpu.dynamic_rotate %39 by %c124_i32 dim 1 : vector<8x128xf32>, i32 -> vector<8x128xf32>
    %cst_19 = arith.constant 0.449328959 : f32
    %45 = vector.broadcast %cst_19 : f32 to vector<8x128xf32>
    %46 = arith.mulf %45, %44 : vector<8x128xf32>
    %47 = arith.addf %39, %46 : vector<8x128xf32>
    %c122_i32 = arith.constant 122 : i32
    %48 = tpu.dynamic_rotate %47 by %c122_i32 dim 1 : vector<8x128xf32>, i32 -> vector<8x128xf32>
    %cst_20 = arith.constant 0.301194221 : f32
    %49 = vector.broadcast %cst_20 : f32 to vector<8x128xf32>
    %50 = arith.mulf %49, %48 : vector<8x128xf32>
    %51 = arith.addf %43, %50 : vector<8x128xf32>
    %c120_i32 = arith.constant 120 : i32
    %52 = tpu.dynamic_rotate %47 by %c120_i32 dim 1 : vector<8x128xf32>, i32 -> vector<8x128xf32>
    %cst_21 = arith.constant 0.201896518 : f32
    %53 = vector.broadcast %cst_21 : f32 to vector<8x128xf32>
    %54 = arith.mulf %53, %52 : vector<8x128xf32>
    %55 = arith.addf %47, %54 : vector<8x128xf32>
    %c114_i32 = arith.constant 114 : i32
    %56 = tpu.dynamic_rotate %55 by %c114_i32 dim 1 : vector<8x128xf32>, i32 -> vector<8x128xf32>
    %cst_22 = arith.constant 0.060810063 : f32
    %57 = vector.broadcast %cst_22 : f32 to vector<8x128xf32>
    %58 = arith.mulf %57, %56 : vector<8x128xf32>
    %59 = arith.addf %51, %58 : vector<8x128xf32>
    %c15_i32 = arith.constant 15 : i32
    %60 = tpu.dynamic_rotate %59 by %c15_i32 dim 1 : vector<8x128xf32>, i32 -> vector<8x128xf32>
    %61 = arith.mulf %60, %60 : vector<8x128xf32>
    %cst_23 = arith.constant 0.000000e+00 : f32
    %62 = vector.shape_cast %7 : vector<1x128xi1> to vector<1x128xi1>
    %63 = vector.broadcast %62 : vector<1x128xi1> to vector<8x128xi1>
    %64 = vector.broadcast %cst_23 : f32 to vector<8x128xf32>
    %65 = arith.select %63, %61, %64 : vector<8x128xi1>, vector<8x128xf32>
    %66 = vector.shape_cast %65 : vector<8x128xf32> to vector<1x8x128xf32>
    %cst_24 = arith.constant dense<0.000000e+00> : vector<1xf32>
    %67 = vector.multi_reduction <add>, %66, %cst_24 [1, 2] : vector<1x8x128xf32> to vector<1xf32>
    %68 = vector.shape_cast %67 : vector<1xf32> to vector<1x1x1xf32>
    %69 = vector.extract %68[0, 0, 0] : f32 from vector<1x1x1xf32>
    %70 = tpu.iota {dimensions = array<i32: 1>} : vector<1x128xi32>
    %c0_i32 = arith.constant 0 : i32
    %71 = vector.broadcast %c0_i32 : i32 to vector<1x128xi32>
    %72 = arith.cmpi eq, %70, %71 : vector<1x128xi32>
    %cst_25 = arith.constant 0.000000e+00 : f32
    %73 = vector.broadcast %30 : f32 to vector<1x128xf32>
    %74 = vector.broadcast %cst_25 : f32 to vector<1x128xf32>
    %75 = arith.select %72, %73, %74 : vector<1x128xi1>, vector<1x128xf32>
    %c1_i32 = arith.constant 1 : i32
    %76 = vector.broadcast %c1_i32 : i32 to vector<1x128xi32>
    %77 = arith.cmpi eq, %70, %76 : vector<1x128xi32>
    %cst_26 = arith.constant 0.000000e+00 : f32
    %78 = vector.broadcast %69 : f32 to vector<1x128xf32>
    %79 = vector.broadcast %cst_26 : f32 to vector<1x128xf32>
    %80 = arith.select %77, %78, %79 : vector<1x128xi1>, vector<1x128xf32>
    %81 = arith.addf %75, %80 : vector<1x128xf32>
    %c0_27 = arith.constant 0 : index
    %c0_28 = arith.constant 0 : index
    %c0_29 = arith.constant 0 : index
    %82 = vector.load %arg5[%c0_27, %c0_28, %c0_29] : memref<1x1x128xf32, #tpu.memory_space<vmem>>, vector<1x1x128xf32>
    %83 = vector.shape_cast %82 : vector<1x1x128xf32> to vector<1x128xf32>
    %84 = vector.shape_cast %81 : vector<1x128xf32> to vector<1x1x128xf32>
    tpu.vector_store %arg5[%c0_27, %c0_28, %c0_29], %84 {strides = array<i32>} : memref<1x1x128xf32, #tpu.memory_space<vmem>>, vector<1x1x128xf32>,
    return
  }
  func.func @transform_0(%arg0: i32, %arg1: i32) -> (i32, i32, i32) {
    %c0_i32 = arith.constant 0 : i32
    %c0_i32_0 = arith.constant 0 : i32
    return %arg0, %arg1, %c0_i32 : i32, i32, i32
  }
  func.func @transform_1(%arg0: i32, %arg1: i32) -> (i32, i32, i32) {
    %c0_i32 = arith.constant 0 : i32
    %c0_i32_0 = arith.constant 0 : i32
    return %arg0, %arg1, %c0_i32 : i32, i32, i32
  }
  func.func @transform_2(%arg0: i32, %arg1: i32) -> (i32, i32, i32) {
    %c0_i32 = arith.constant 0 : i32
    %c0_i32_0 = arith.constant 0 : i32
    %c0_i32_1 = arith.constant 0 : i32
    return %arg0, %c0_i32, %c0_i32_0 : i32, i32, i32
  }
  func.func @transform_3(%arg0: i32, %arg1: i32) -> (i32, i32, i32) {
    %c1_i32 = arith.constant 1 : i32
    %0 = arith.muli %arg0, %c1_i32 : i32
    %1 = arith.addi %0, %arg1 : i32
    %c0_i32 = arith.constant 0 : i32
    %c0_i32_0 = arith.constant 0 : i32
    %c0_i32_1 = arith.constant 0 : i32
    return %1, %c0_i32, %c0_i32_0 : i32, i32, i32
  }
}

</mosaic_0001>

<llo_original>
// kernel: tpu_custom_call.1
$region0: #{tpu_custom_call.1}
  #allocation0 [shape = 'u32[]', space=smem, size = 0x4, offset = 0x4, fixed_abs, tag = 'smem constant byte address 0x4 - core index']
  #allocation1 [shape = 'u32[144,128]{1,0:T(1,128)}', space=vmem, size = 0x12000, scoped, tag = 'internal scratch']
  %s0 = inlined_call_operand.hbm [shape: f32[2,8,128], index: 0, kind: input, shape index: {}]
  %s1 = inlined_call_operand.hbm [shape: f32[2,8,128], index: 1, kind: input, shape index: {}]
  %s2 = inlined_call_operand.vmem [shape: f32[2,1,128], index: 2, kind: input, shape index: {}]
  %s3 = inlined_call_operand.hbm [shape: f32[2,1,128], index: 3, kind: output, shape index: {}]
  %s4 = sld [smem:[#allocation0]]
  $region53: #{tpu_custom_call.1} parent=0
    _
  %s6 = ssub.s32 1, %s4
  %s7 = scalar_select 0, %s6, %s4
  $region1: #{tpu_custom_call.1} parent=0
    #allocation2 [shape = 'u8[8192]{0}', space=vmem, size = 0x2000, scoped, tag = 'input window, operand 0']
    #allocation3 [shape = 's32[2]{0}', space=sflag, size = 0x8, scoped, tag = 'scoped memory for tpu_custom_call.1']
    #allocation4 [shape = 's32[2]{0}', space=sflag, size = 0x8, scoped, tag = 'scoped memory for tpu_custom_call.1']
    #allocation5 [shape = 'u8[8192]{0}', space=vmem, size = 0x2000, scoped, tag = 'input window, operand 1']
    #allocation6 [shape = 's32[2]{0}', space=sflag, size = 0x8, scoped, tag = 'scoped memory for tpu_custom_call.1']
    #allocation7 [shape = 'u8[1024]{0}', space=vmem, size = 0x400, scoped, tag = 'output window, operand 0']
    %8 = vsyncpa [#allocation3], 0
    %s9 = scalar_lea.sflag [#allocation3], 1
    %10 = vsyncpa %s9, 0
    %11 = vsyncpa [#allocation6], 0
    %s12 = scalar_lea.sflag [#allocation6], 1
    %13 = vsyncpa %s12, 0
    %14 = vsyncpa [#allocation4], 0
    %s15 = scalar_lea.sflag [#allocation4], 1
    %16 = vsyncpa %s15, 0
    loop: start=0, step=1, limit=4
    $region2: #{tpu_custom_call.1} parent=1 // loop_pre_header
      _
    $region3: #{tpu_custom_call.1} parent=1 // loop_header
      %s18 = sphi 0, %s22
      %p19 = scmp.ge.s32.totalorder %s18, 4
      %s25 = sphi 0, %s37
      %s26 = sphi 0, %s33
      %s27 = sphi 0, %s25
      %s28 = sphi 0, %s26
      %s29 = sphi 0, %s27
      %s30 = sphi 0, %s28
      %s42 = sphi 0, %s44
      %s45 = sphi 0, %s42
      %s46 = sphi 0, %s45
      %s62 = sphi 0, %s46
      %s70 = sphi 0, %s72
      %s73 = sphi 0, %s70
      %s74 = sphi 0, %s73
      %s90 = sphi 0, %s74
      %s96 = sphi 0, %s98
      %s99 = sphi 0, %s96
      %s100 = sphi 0, %s99
      %s116 = sphi 0, %s100
      %s124 = sphi 0, %s126
      %s127 = sphi 0, %s124
      %s128 = sphi 0, %s127
      %s144 = sphi 0, %s128
    $region4: #{tpu_custom_call.1} parent=1 // loop_header_branch
      %21 = sbr.rel (%p19) target = $region8
    $region5: #{tpu_custom_call.1} parent=1 // loop_body
      %s23 = ssub.s32 %s18, 1
      %s24 = ssub.s32 %s18, 2
      %s31 = sadd.s32 1, %s26
      %p32 = scmp.ge.s32.totalorder %s31, 1
      %s33 = scalar_select %p32, 0, %s31
      %s34 = sadd.s32 1, %s25
      %s35 = scalar_select %p32, %s34, %s25
      %p36 = scmp.ge.s32.totalorder %s35, 2
      %s37 = scalar_select %p36, 0, %s35
      %s38 = ssub.s32 %s25, %s37
      %s39 = ssub.s32 %s26, %s33
      %s40 = sor.u32 %s38, %s39
      %p41 = scmp.eq.s32.totalorder %s40, 0
      %s43 = sadd.s32 %s42, 1
      %s44 = scalar_select %p41, %s42, %s43
      %p47 = pneg %p41
      %p48 = scmp.eq.s32.totalorder %s18, 1
      %p49 = por %p47, %p48
      %p50 = scmp.ne.s32.totalorder %s42, %s45
      %p51 = scmp.eq.s32.totalorder %s18, 0
      %p52 = por %p50, %p51
      %p53 = scmp.ne.s32.totalorder %s42, %s45
      %p54 = scmp.eq.s32.totalorder %s23, 1
      %p55 = por %p53, %p54
      %p56 = scmp.ne.s32.totalorder %s45, %s46
      %p57 = scmp.eq.s32.totalorder %s23, 0
      %p58 = por %p56, %p57
      %p59 = scmp.ne.s32.totalorder %s45, %s46
      %p60 = scmp.eq.s32.totalorder %s24, 1
      %p61 = por %p59, %p60
      %p63 = scmp.ne.s32.totalorder %s46, %s62
      %p64 = scmp.eq.s32.totalorder %s24, 0
      %p65 = por %p63, %p64
      %s66 = ssub.s32 %s25, %s37
      %s67 = ssub.s32 %s26, %s33
      %s68 = sor.u32 %s66, %s67
      %p69 = scmp.eq.s32.totalorder %s68, 0
      %s71 = sadd.s32 %s70, 1
      %s72 = scalar_select %p69, %s70, %s71
      %p75 = pneg %p69
      %p76 = scmp.eq.s32.totalorder %s18, 1
      %p77 = por %p75, %p76
      %p78 = scmp.ne.s32.totalorder %s70, %s73
      %p79 = scmp.eq.s32.totalorder %s18, 0
      %p80 = por %p78, %p79
      %p81 = scmp.ne.s32.totalorder %s70, %s73
      %p82 = scmp.eq.s32.totalorder %s23, 1
      %p83 = por %p81, %p82
      %p84 = scmp.ne.s32.totalorder %s73, %s74
      %p85 = scmp.eq.s32.totalorder %s23, 0
      %p86 = por %p84, %p85
      %p87 = scmp.ne.s32.totalorder %s73, %s74
      %p88 = scmp.eq.s32.totalorder %s24, 1
      %p89 = por %p87, %p88
      %p91 = scmp.ne.s32.totalorder %s74, %s90
      %p92 = scmp.eq.s32.totalorder %s24, 0
      %p93 = por %p91, %p92
      %s94 = ssub.s32 %s25, %s37
      %p95 = scmp.eq.s32.totalorder %s94, 0
      %s97 = sadd.s32 %s96, 1
      %s98 = scalar_select %p95, %s96, %s97
      %p101 = pneg %p95
      %p102 = scmp.eq.s32.totalorder %s18, 1
      %p103 = por %p101, %p102
      %p104 = scmp.ne.s32.totalorder %s96, %s99
      %p105 = scmp.eq.s32.totalorder %s18, 0
      %p106 = por %p104, %p105
      %p107 = scmp.ne.s32.totalorder %s96, %s99
      %p108 = scmp.eq.s32.totalorder %s23, 1
      %p109 = por %p107, %p108
      %p110 = scmp.ne.s32.totalorder %s99, %s100
      %p111 = scmp.eq.s32.totalorder %s23, 0
      %p112 = por %p110, %p111
      %p113 = scmp.ne.s32.totalorder %s99, %s100
      %p114 = scmp.eq.s32.totalorder %s24, 1
      %p115 = por %p113, %p114
      %p117 = scmp.ne.s32.totalorder %s100, %s116
      %p118 = scmp.eq.s32.totalorder %s24, 0
      %p119 = por %p117, %p118
      %s120 = sadd.s32 %s25, %s26
      %s121 = sadd.s32 %s37, %s33
      %s122 = ssub.s32 %s120, %s121
      %p123 = scmp.eq.s32.totalorder %s122, 0
      %s125 = sadd.s32 %s124, 1
      %s126 = scalar_select %p123, %s124, %s125
      %p129 = pneg %p123
      %p130 = scmp.eq.s32.totalorder %s18, 1
      %p131 = por %p129, %p130
      %p132 = scmp.ne.s32.totalorder %s124, %s127
      %p133 = scmp.eq.s32.totalorder %s18, 0
      %p134 = por %p132, %p133
      %p135 = scmp.ne.s32.totalorder %s124, %s127
      %p136 = scmp.eq.s32.totalorder %s23, 1
      %p137 = por %p135, %p136
      %p138 = scmp.ne.s32.totalorder %s127, %s128
      %p139 = scmp.eq.s32.totalorder %s23, 0
      %p140 = por %p138, %p139
      %p141 = scmp.ne.s32.totalorder %s127, %s128
      %p142 = scmp.eq.s32.totalorder %s24, 1
      %p143 = por %p141, %p142
      %p145 = scmp.ne.s32.totalorder %s128, %s144
      %p146 = scmp.eq.s32.totalorder %s24, 0
      %p147 = por %p145, %p146
      %p148 = scmp.le.s32.totalorder 1, %s18
      %p149 = scmp.lt.s32.totalorder %s18, 3
      %p150 = pnand %p148, %p149
      %p151 = pneg %p150
      // Predicated region
      $region9: #{tpu_custom_call.1} parent=5 // pred_check
        _
      $region10: #{tpu_custom_call.1} parent=5 // pred_check_branch
        %153 = sbr.rel (%p150) target = $region12
      $region11: #{tpu_custom_call.1} parent=5 // pred_region
        %s154 = ssub.s32 %s18, 1
      $region12: #{tpu_custom_call.1} parent=5 // pred_fallthru
        _
      %p155 = scmp.lt.s32.totalorder %s18, 2
      // Predicated region
      $region13: #{tpu_custom_call.1} parent=5 // pred_check
        %p156 = pneg %p155
      $region14: #{tpu_custom_call.1} parent=5 // pred_check_branch
        %158 = sbr.rel (%p156) target = $region16
      $region15: #{tpu_custom_call.1} parent=5 // pred_region
        // Predicated region
        $region17: #{tpu_custom_call.1} parent=15 // pred_check
          %p159 = pneg %p52
        $region18: #{tpu_custom_call.1} parent=15 // pred_check_branch
          %161 = sbr.rel (%p159) target = $region20
        $region19: #{tpu_custom_call.1} parent=15 // pred_region
          %s162 = sand.u32 %s42, 1
          %s163 = scalar_lea.sflag [#allocation3], %s162
          %s164 = sand.u32 %s42, 1
          %s165 = smul.addr %s164, 8
          %s166 = scalar_lea.vmem [#allocation2], %s165
          %s168 = ssub.s32 128, 128
          %169 = vsyncadd %s163, %s168
          %s170 = sadd.s32 %s26, %s25
          %s171 = smul.addr %s170, 128
          %s172 = scalar_lea.hbm %s0, %s171
          %s174 = sshll.u32 %s166, 4
          %s175 = int_to_ptr.vmem [resolvable:$true] %s174
          %177 = dma.hbm_to_vmem [thread:$0]  %s172, 128, %s175, %s163
        $region20: #{tpu_custom_call.1} parent=15 // pred_fallthru
          _
        // Predicated region
        $region21: #{tpu_custom_call.1} parent=15 // pred_check
          %p178 = pneg %p80
        $region22: #{tpu_custom_call.1} parent=15 // pred_check_branch
          %180 = sbr.rel (%p178) target = $region24
        $region23: #{tpu_custom_call.1} parent=15 // pred_region
          %s181 = sand.u32 %s70, 1
          %s182 = scalar_lea.sflag [#allocation6], %s181
          %s183 = sand.u32 %s70, 1
          %s184 = smul.addr %s183, 8
          %s185 = scalar_lea.vmem [#allocation5], %s184
          %s187 = ssub.s32 128, 128
          %188 = vsyncadd %s182, %s187
          %s189 = sadd.s32 %s26, %s25
          %s190 = smul.addr %s189, 128
          %s191 = scalar_lea.hbm %s1, %s190
          %s193 = sshll.u32 %s185, 4
          %s194 = int_to_ptr.vmem [resolvable:$true] %s193
          %196 = dma.hbm_to_vmem [thread:$0]  %s191, 128, %s194, %s182
        $region24: #{tpu_custom_call.1} parent=15 // pred_fallthru
          _
        // Predicated region
        $region25: #{tpu_custom_call.1} parent=15 // pred_check
          %p197 = pneg %p106
        $region26: #{tpu_custom_call.1} parent=15 // pred_check_branch
          %199 = sbr.rel (%p197) target = $region28
        $region27: #{tpu_custom_call.1} parent=15 // pred_region
          %p200 = scmp.lt.s32.totalorder %s25, 1
          %s201 = scalar_select %p200, %s25, 1
          %s202 = scalar_lea.vmem %s2, %s201
        $region28: #{tpu_custom_call.1} parent=15 // pred_fallthru
          _
      $region16: #{tpu_custom_call.1} parent=5 // pred_fallthru
        _
      %p203 = scmp.le.s32.totalorder 1, %s18
      %p204 = scmp.lt.s32.totalorder %s18, 3
      %p205 = pnand %p203, %p204
      %p206 = pneg %p205
      // Predicated region
      $region29: #{tpu_custom_call.1} parent=5 // pred_check
        _
      $region30: #{tpu_custom_call.1} parent=5 // pred_check_branch
        %208 = sbr.rel (%p205) target = $region32
      $region31: #{tpu_custom_call.1} parent=5 // pred_region
        %s209 = ssub.s32 %s18, 1
        %s210 = sand.u32 %s45, 1
        %s211 = scalar_lea.sflag [#allocation3], %s210
        %s212 = sand.u32 %s45, 1
        %s213 = smul.addr %s212, 8
        %s214 = scalar_lea.vmem [#allocation2], %s213
        // Predicated region
        $region33: #{tpu_custom_call.1} parent=31 // pred_check
          %p215 = pneg %p58
        $region34: #{tpu_custom_call.1} parent=31 // pred_check_branch
          %217 = sbr.rel (%p215) target = $region36
        $region35: #{tpu_custom_call.1} parent=31 // pred_region
          %218 = dma.done %s211, 128
        $region36: #{tpu_custom_call.1} parent=31 // pred_fallthru
          _
        %s219 = sand.u32 %s73, 1
        %s220 = scalar_lea.sflag [#allocation6], %s219
        %s221 = sand.u32 %s73, 1
        %s222 = smul.addr %s221, 8
        %s223 = scalar_lea.vmem [#allocation5], %s222
        // Predicated region
        $region37: #{tpu_custom_call.1} parent=31 // pred_check
          %p224 = pneg %p86
        $region38: #{tpu_custom_call.1} parent=31 // pred_check_branch
          %226 = sbr.rel (%p224) target = $region40
        $region39: #{tpu_custom_call.1} parent=31 // pred_region
          %227 = dma.done %s220, 128
        $region40: #{tpu_custom_call.1} parent=31 // pred_fallthru
          _
        %s228 = sand.u32 %s45, 1
        %s229 = scalar_lea.sflag [#allocation3], %s228
        %s230 = sand.u32 %s45, 1
        %s231 = smul.addr %s230, 8
        %s232 = scalar_lea.vmem [#allocation2], %s231
        %p233 = pneg %p58
        %p234 = pneg %p55
        %s235 = sand.u32 %s73, 1
        %s236 = scalar_lea.sflag [#allocation6], %s235
        %s237 = sand.u32 %s73, 1
        %s238 = smul.addr %s237, 8
        %s239 = scalar_lea.vmem [#allocation5], %s238
        %p240 = pneg %p86
        %p241 = pneg %p83
        %p242 = scmp.lt.s32.totalorder %s27, 1
        %s243 = scalar_select %p242, %s27, 1
        %s244 = scalar_lea.vmem %s2, %s243
        %p245 = pneg %p112
        %p246 = pneg %p109
        %p247 = pneg %p140
        %p248 = pneg %p137
        %s249 = sand.u32 %s127, 1
        %s250 = scalar_lea.sflag [#allocation4], %s249
        %s251 = sand.u32 %s127, 1
        %s252 = scalar_lea.vmem [#allocation7], %s251
        %p253 = scmp.lt.s32.totalorder %s27, 1
        %s254 = scalar_select %p253, %s27, 1
        %s255 = scalar_lea.vmem %s2, %s254
        %s256 = sadd.s32 %s27, %s28
        %v257 = vld [vmem:[%s214] sm:$0xff]
        %v258 = vld [vmem:[%s223] sm:$0xff]
        %v259 = vld [vmem:[%s255] sm:$0x1]
        %vm260 = vcmp.gt.f32.partialorder %v259, 0.5
        %v261 = vlog2.pop %v257
        %v262 = vmul.f32 %v261, 0.6931472
        %v263 = vmax.f32 %v262, -100.0
        %v264 = vsub.f32 1.0, %v257
        %v265 = vlog2.pop %v264
        %v266 = vmul.f32 %v265, 0.6931472
        %v267 = vmax.f32 %v266, -100.0
        %v268 = vmul.f32 %v258, %v263
        %v269 = vsub.f32 1.0, %v258
        %v270 = vmul.f32 %v269, %v267
        %v271 = vadd.f32 %v268, %v270
        %v272 = vsub.f32 0.0, %v271
        %v273 = vsel %vm260, 1, 0
        %v274 = vlaneseq
        %v275 = vshrl.u32 %v274, 7
        %v276 = vsub.s32 0, %v275
        %v277 = vrot.slane %v273, %v276
        %vm278 = vcmp.eq.s32.totalorder %v277, 1
        %v279 = vsel %vm278, %v272, 0.0
        %280 = vadd.xlane.f32.xlu0 %v279
        %v281 = vpop.xlane.xlu0 %280
        %v282 = vrot.slane %v281, 4
        %v283 = vadd.f32 %v281, %v282
        %v284 = vrot.slane %v283, 2
        %v285 = vadd.f32 %v283, %v284
        %v286 = vrot.slane %v285, 1
        %v287 = vadd.f32 %v285, %v286
        %s288 = vtos %v287
        %v289 = vsub.f32 %v257, %v258
        %290 = vrot.lane.b32.xlu0 %v289, 127
        %v291 = vpop.permute.xlu0 %290
        %v292 = vmul.f32 %v291, 0.8187308
        %v293 = vadd.f32 %v289, %v292
        %294 = vrot.lane.b32.xlu0 %v293, 126
        %v295 = vpop.permute.xlu0 %294
        %v296 = vmul.f32 %v295, 0.67032003
        %v297 = vadd.f32 %v293, %v296
        %298 = vrot.lane.b32.xlu0 %v297, 126
        %v299 = vpop.permute.xlu0 %298
        %v300 = vmul.f32 %v299, 0.67032003
        %v301 = vadd.f32 %v293, %v300
        %302 = vrot.lane.b32.xlu0 %v297, 124
        %v303 = vpop.permute.xlu0 %302
        %v304 = vmul.f32 %v303, 0.44932896
        %v305 = vadd.f32 %v297, %v304
        %306 = vrot.lane.b32.xlu0 %v305, 122
        %v307 = vpop.permute.xlu0 %306
        %v308 = vmul.f32 %v307, 0.30119422
        %v309 = vadd.f32 %v301, %v308
        %310 = vrot.lane.b32.xlu0 %v305, 120
        %v311 = vpop.permute.xlu0 %310
        %v312 = vmul.f32 %v311, 0.20189652
        %v313 = vadd.f32 %v305, %v312
        %314 = vrot.lane.b32.xlu0 %v313, 114
        %v315 = vpop.permute.xlu0 %314
        %v316 = vmul.f32 %v315, 0.060810063
        %v317 = vadd.f32 %v309, %v316
        %318 = vrot.lane.b32.xlu0 %v317, 15
        %v319 = vpop.permute.xlu0 %318
        %v320 = vmul.f32 %v319, %v319
        %v321 = vsel %vm278, %v320, 0.0
        %322 = vadd.xlane.f32.xlu0 %v321
        %v323 = vpop.xlane.xlu0 %322
        %v324 = vrot.slane %v323, 4
        %v325 = vadd.f32 %v323, %v324
        %v326 = vrot.slane %v325, 2
        %v327 = vadd.f32 %v325, %v326
        %v328 = vrot.slane %v327, 1
        %v329 = vadd.f32 %v327, %v328
        %s330 = vtos %v329
        %v331 = vlaneseq
        %v332 = vand.u32 %v331, 127
        %vm333 = vcmp.eq.s32.totalorder %v332, 0
        %v334 = vstv %s288
        %v335 = vsel %vm333, %v334, 0.0
        %vm336 = vcmp.eq.s32.totalorder %v332, 1
        %v337 = vstv %s330
        %v338 = vsel %vm336, %v337, 0.0
        %v339 = vadd.f32 %v335, %v338
        %340 = vst [vmem:[%s252] sm:$0x1] %v339
        %s341 = sand.u32 %s127, 1
        %s342 = scalar_lea.sflag [#allocation4], %s341
        %s343 = sand.u32 %s127, 1
        %s344 = scalar_lea.vmem [#allocation7], %s343
        // Predicated region
        $region41: #{tpu_custom_call.1} parent=31 // pred_check
          %p345 = pneg %p137
        $region42: #{tpu_custom_call.1} parent=31 // pred_check_branch
          %347 = sbr.rel (%p345) target = $region44
        $region43: #{tpu_custom_call.1} parent=31 // pred_region
          %s348 = sadd.s32 %s27, %s28
          %s350 = ssub.s32 16, 16
          %351 = vsyncadd %s342, %s350
          %s352 = smul.addr %s348, 16
          %s353 = scalar_lea.hbm %s3, %s352
          %s355 = sshll.u32 %s344, 4
          %s356 = int_to_ptr.vmem [resolvable:$true] %s355
          %358 = dma.vmem_to_hbm [thread:$0]  %s356, 16, %s353, %s342
        $region44: #{tpu_custom_call.1} parent=31 // pred_fallthru
          _
      $region32: #{tpu_custom_call.1} parent=5 // pred_fallthru
        _
      %p359 = scmp.le.s32.totalorder 2, %s18
      // Predicated region
      $region45: #{tpu_custom_call.1} parent=5 // pred_check
        %p360 = pneg %p359
      $region46: #{tpu_custom_call.1} parent=5 // pred_check_branch
        %362 = sbr.rel (%p360) target = $region48
      $region47: #{tpu_custom_call.1} parent=5 // pred_region
        %s363 = ssub.s32 %s18, 2
        // Predicated region
        $region49: #{tpu_custom_call.1} parent=47 // pred_check
          %p364 = pneg %p143
        $region50: #{tpu_custom_call.1} parent=47 // pred_check_branch
          %366 = sbr.rel (%p364) target = $region52
        $region51: #{tpu_custom_call.1} parent=47 // pred_region
          %s367 = sand.u32 %s128, 1
          %s368 = scalar_lea.sflag [#allocation4], %s367
          %s369 = sand.u32 %s128, 1
          %s370 = scalar_lea.vmem [#allocation7], %s369
          %371 = dma.done %s368, 16
        $region52: #{tpu_custom_call.1} parent=47 // pred_fallthru
          _
      $region48: #{tpu_custom_call.1} parent=5 // pred_fallthru
        _
    $region6: #{tpu_custom_call.1} parent=1 // loop_footer
      %s22 = sadd.s32 1, %s18
    $region7: #{tpu_custom_call.1} parent=1 // loop_footer_branch
      %17 = sbr.rel target = $region3
    $region8: #{tpu_custom_call.1} parent=1 // loop_exit
      _
    %372 = vsyncpa [#allocation3], 1
    %s373 = scalar_lea.sflag [#allocation3], 1
    %374 = vsyncpa %s373, 1
    %375 = vsyncpa [#allocation6], 1
    %s376 = scalar_lea.sflag [#allocation6], 1
    %377 = vsyncpa %s376, 1
    %378 = vsyncpa [#allocation4], 1
    %s379 = scalar_lea.sflag [#allocation4], 1
    %380 = vsyncpa %s379, 1

</llo_original>
